<compile_context>
chip_gen: v7x
topology: tpu7x:2x2x1
jax: 0.10.0
libtpu: 0.0.40
codegen_flags: <defaults>
</compile_context>

<pallas_src>
import jax
import jax.numpy as jnp
from jax.experimental import pallas as pl
from jax.experimental.pallas import tpu as pltpu


# ----------------------------------------------------------------------------
# Path 1 (hot path): pure identity — no kernel, no overhead.
# ----------------------------------------------------------------------------
def identity_map(x: jax.Array, *args, **kwargs) -> jax.Array:
    """IdentityMap.forward: return x unchanged (zero cost, no custom call)."""
    del args, kwargs
    return x


# ----------------------------------------------------------------------------
# Path 2: materialized copy via direct HBM->HBM DMA (no VMEM staging).
# ----------------------------------------------------------------------------
def _make_dma_copy_kernel(chunks):
    """Build a kernel that copies `chunks` [(start, size), ...] of the leading
    dim from the input HBM ref to the output HBM ref via async DMA."""

    def kernel(x_hbm_ref, o_hbm_ref, sem):
        copies = []
        for c, (start, size) in enumerate(chunks):
            cp = pltpu.make_async_copy(
                x_hbm_ref.at[pl.ds(start, size)],
                o_hbm_ref.at[pl.ds(start, size)],
                sem.at[c],
            )
            cp.start()
            copies.append(cp)
        for cp in copies:
            cp.wait()

    return kernel


def identity_map_copy(x: jax.Array) -> jax.Array:
    """Identity that returns a fresh output buffer (1x read + 1x write HBM)."""
    if x.size == 0:
        # Nothing to copy; preserve shape/dtype.
        return x

    orig_shape = x.shape
    # 0-d scalars: give the DMA at least one dimension to slice over.
    xr = x.reshape((1,)) if x.ndim == 0 else x

    lead = xr.shape[0]
    # Split big copies into up to 4 contiguous leading-dim chunks so several
    # DMA queues stay busy; small copies use a single descriptor.
    if x.nbytes >= (1 << 20) and lead >= 2:
        num_chunks = min(4, lead)
    else:
        num_chunks = 1
    bounds = [(i * lead) // num_chunks for i in range(num_chunks + 1)]
    chunks = [
        (bounds[i], bounds[i + 1] - bounds[i])
        for i in range(num_chunks)
        if bounds[i + 1] > bounds[i]
    ]

    out = pl.pallas_call(
        _make_dma_copy_kernel(chunks),
        out_shape=jax.ShapeDtypeStruct(xr.shape, xr.dtype),
        in_specs=[pl.BlockSpec(memory_space=pl.ANY)],    # raw HBM ref, no auto-DMA
        out_specs=pl.BlockSpec(memory_space=pl.ANY),     # raw HBM ref, no auto-DMA
        scratch_shapes=[pltpu.SemaphoreType.DMA((len(chunks),))],
        cost_estimate=pl.CostEstimate(
            flops=0, transcendentals=0, bytes_accessed=2 * x.nbytes
        ),
    )(xr)

    return out.reshape(orig_shape)


# ----------------------------------------------------------------------------
# Path 3 (optional): aliased Pallas entry point (only if a kernel is required).
# Callers must donate x (jax.jit(donate_argnums=...)) for this to be traffic
# free; otherwise XLA inserts a defensive copy of x before the call.
# ----------------------------------------------------------------------------
def _identity_alias_kernel(x_hbm_ref, o_hbm_ref):
    del x_hbm_ref, o_hbm_ref  # output buffer is the input buffer; nothing to move


def identity_map_aliased(x: jax.Array) -> jax.Array:
    if x.ndim == 0:
        return x
    return pl.pallas_call(
        _identity_alias_kernel,
        out_shape=jax.ShapeDtypeStruct(x.shape, x.dtype),
        in_specs=[pl.BlockSpec(memory_space=pl.ANY)],
        out_specs=pl.BlockSpec(memory_space=pl.ANY),
        input_output_aliases={0: 0},
    )(x)


if __name__ == "__main__":
    key = jax.random.PRNGKey(0)
    # Small example input consistent with a generic feature map: (B, C, H, W).
    x = jax.random.normal(key, (2, 4, 16, 16), dtype=jnp.float32)

    # Hot path: pure identity, no kernel.
    y = identity_map(x)
    jax.block_until_ready(y)
    assert y.shape == x.shape and y.dtype == x.dtype
    assert bool(jnp.all(y == x))

    # Materialized copy via direct HBM->HBM DMA.
    y_copy = identity_map_copy(x)
    jax.block_until_ready(y_copy)
    assert y_copy.shape == x.shape and y_copy.dtype == x.dtype
    assert bool(jnp.all(y_copy == x))

    # DMA path has no 128-divisibility requirement: odd total size works too.
    x_odd = jax.random.normal(jax.random.PRNGKey(1), (3, 5, 7), dtype=jnp.float32)
    y_odd = identity_map_copy(x_odd)
    jax.block_until_ready(y_odd)
    assert y_odd.shape == x_odd.shape and bool(jnp.all(y_odd == x_odd))

    # Sub-32-bit dtype (pure byte move; no widening needed on any generation).
    xb = x.astype(jnp.bfloat16)
    yb = identity_map_copy(xb)
    jax.block_until_ready(yb)
    assert yb.shape == xb.shape and yb.dtype == jnp.bfloat16
    assert bool(jnp.all(yb == xb))

    # Optional aliased Pallas entry point (runs fine; traffic-free only when
    # the caller donates the input buffer).
    y_alias = identity_map_aliased(x)
    jax.block_until_ready(y_alias)
    assert y_alias.shape == x.shape and bool(jnp.all(y_alias == x))

    print("KERNEL_OK")
</pallas_src>

<mosaic_0001>
module attributes {stable_mosaic.version = 11 : i64} {
  func.func @kernel(%arg0: memref<2x4x16x16xf32, #tpu.memory_space<any>>, %arg1: memref<2x4x16x16xf32, #tpu.memory_space<any>>, %arg2: memref<1x!tpu.dma_semaphore, #tpu.memory_space<semaphore_mem>>) attributes {dimension_semantics = [], scalar_prefetch = 0 : i64, scratch_operands = 1 : i64, tpu.core_type = #tpu.core_type<tc>} {
    %c0_i32 = arith.constant 0 : i32
    %c0_i32_0 = arith.constant 0 : i32
    %c0_i32_1 = arith.constant 0 : i32
    %c0_i32_2 = arith.constant 0 : i32
    %c0_i32_3 = arith.constant 0 : i32
    %0 = tpu.memref_slice %arg0[%c0_i32_0, %c0_i32_1, %c0_i32_2, %c0_i32_3] : memref<2x4x16x16xf32, #tpu.memory_space<any>> -> memref<2x4x16x16xf32, #tpu.memory_space<any>>
    %c0_i32_4 = arith.constant 0 : i32
    %c0_i32_5 = arith.constant 0 : i32
    %c0_i32_6 = arith.constant 0 : i32
    %c0_i32_7 = arith.constant 0 : i32
    %1 = tpu.memref_slice %arg1[%c0_i32_4, %c0_i32_5, %c0_i32_6, %c0_i32_7] : memref<2x4x16x16xf32, #tpu.memory_space<any>> -> memref<2x4x16x16xf32, #tpu.memory_space<any>>
    %2 = tpu.memref_slice %arg2[%c0_i32] : memref<1x!tpu.dma_semaphore, #tpu.memory_space<semaphore_mem>> -> memref<1x!tpu.dma_semaphore, #tpu.memory_space<semaphore_mem>>
    %3 = tpu.memref_squeeze %2 : memref<1x!tpu.dma_semaphore, #tpu.memory_space<semaphore_mem>> -> memref<!tpu.dma_semaphore, #tpu.memory_space<semaphore_mem>>
    tpu.enqueue_dma source(%0 : memref<2x4x16x16xf32, #tpu.memory_space<any>>) target(%1 : memref<2x4x16x16xf32, #tpu.memory_space<any>>) target_semaphore(%3 : memref<!tpu.dma_semaphore, #tpu.memory_space<semaphore_mem>>)
    %c0_i32_8 = arith.constant 0 : i32
    %c0_i32_9 = arith.constant 0 : i32
    %c0_i32_10 = arith.constant 0 : i32
    %c0_i32_11 = arith.constant 0 : i32
    %c0_i32_12 = arith.constant 0 : i32
    %4 = tpu.memref_slice %arg0[%c0_i32_9, %c0_i32_10, %c0_i32_11, %c0_i32_12] : memref<2x4x16x16xf32, #tpu.memory_space<any>> -> memref<2x4x16x16xf32, #tpu.memory_space<any>>
    %c0_i32_13 = arith.constant 0 : i32
    %c0_i32_14 = arith.constant 0 : i32
    %c0_i32_15 = arith.constant 0 : i32
    %c0_i32_16 = arith.constant 0 : i32
    %5 = tpu.memref_slice %arg1[%c0_i32_13, %c0_i32_14, %c0_i32_15, %c0_i32_16] : memref<2x4x16x16xf32, #tpu.memory_space<any>> -> memref<2x4x16x16xf32, #tpu.memory_space<any>>
    %6 = tpu.memref_slice %arg2[%c0_i32_8] : memref<1x!tpu.dma_semaphore, #tpu.memory_space<semaphore_mem>> -> memref<1x!tpu.dma_semaphore, #tpu.memory_space<semaphore_mem>>
    %7 = tpu.memref_squeeze %6 : memref<1x!tpu.dma_semaphore, #tpu.memory_space<semaphore_mem>> -> memref<!tpu.dma_semaphore, #tpu.memory_space<semaphore_mem>>
    tpu.wait_dma2 semaphore(%7 : memref<!tpu.dma_semaphore, #tpu.memory_space<semaphore_mem>>) src(%4 : memref<2x4x16x16xf32, #tpu.memory_space<any>>) dst(%5 : memref<2x4x16x16xf32, #tpu.memory_space<any>>)
    return
  }
}

</mosaic_0001>

<llo_original>
// kernel: tpu_custom_call.1
$region0: #{tpu_custom_call.1}
  #allocation0 [shape = 'u32[]', space=smem, size = 0x4, offset = 0x4, fixed_abs, tag = 'smem constant byte address 0x4 - core index']
  #allocation1 [shape = 'u32[144,128]{1,0:T(1,128)}', space=vmem, size = 0x12000, scoped, tag = 'internal scratch']
  #allocation2 [shape = 's32[1]{0}', space=sflag, size = 0x4, scoped, tag = 'scratch operand']
  #allocation3 [shape = 's32[]', space=sflag, size = 0x4, offset = 0, fixed_abs, tag = 'sflag constant byte address 0x0 - dummy sync flag']
  #allocation4 [shape = 'u32[0]{0}', space=smem, size = 0, offset = 0, fixed_abs, tag = 'smem constant byte address 0x0 - null']
  %s0 = inlined_call_operand.hbm [shape: f32[2,4,16,16], index: 0, kind: input, shape index: {}]
  %s1 = inlined_call_operand.hbm [shape: f32[2,4,16,16], index: 1, kind: output, shape index: {}]
  %s2 = sld [smem:[#allocation0]]
  $region2: #{tpu_custom_call.1} parent=0
    _
  %s4 = ssub.s32 1, %s2
  %s5 = scalar_select 0, %s4, %s2
  %s7 = sshll.u32 1, 14
  %s8 = sxor.u32 4294967295, %s7
  %s11 = sshll.u32 3, 24
  %s12 = sxor.u32 4294967295, %s11
  %s13 = sand.u32 0, %s12
  %s15 = sor.u32 %s13, 0
  %18 = dma.general %s0, 2048, %s1, [#allocation2], [#allocation3], [#allocation4], %s15, 0
  %s19 = smul.u32 2, 4
  %s20 = smul.u32 %s19, 16
  %s21 = smul.u32 %s20, 1
  %s22 = sshll.u32 %s21, 4
  %23 = dma.done [#allocation2], %s22
  %24 = vsyncmov [#allocation2]
  %s25 = vpop.sfrf %24
  %p26 = scmp.eq.s32.totalorder %s25, 0
  %p27 = pneg %p26
  %29 = shalt.err (%p27)

</llo_original>
